<compile_context>
chip_gen: v7x
topology: tpu7x:2x2x1
jax: 0.10.0
libtpu: 0.0.40
codegen_flags: <defaults>
</compile_context>

<pallas_src>
import jax
import jax.numpy as jnp
from jax.experimental import pallas as pl
from jax.experimental.pallas import tpu as pltpu


# ----------------------------- hardware budgets ----------------------------- #

def _vmem_limit_bytes():
    """Scoped-VMEM limit to request: ~half of physical VMEM, capped at 64 MiB.

    v5e/v6e (128 MiB physical) -> 64 MiB; v7x (64 MiB physical per TC) -> 32 MiB.
    """
    try:
        cap = int(pltpu.get_tpu_info().vmem_capacity_bytes)
    except Exception:
        cap = 64 * 1024 * 1024          # conservative fallback (v7x per-TC physical)
    return max(16 * 1024 * 1024, min(cap // 2, 64 * 1024 * 1024))


# ----------------------------- tiling helpers ------------------------------- #

def _divisors(n):
    return [d for d in range(1, n + 1) if n % d == 0]


def _choose_row_tile(rows, hw, itemsize, max_block_bytes, hw_aligned):
    """Row (sublane-axis) tile.

    Prefers multiples of 8 (full sublane density), <= 64 rows. When HW is not
    128-aligned, the whole HW extent sits in one block, so rows are shrunk until
    the block fits the per-buffer cap (fixes the old full-extent VMEM hazard).
    """
    pref = sorted([d for d in _divisors(rows) if d % 8 == 0 and d <= 64], reverse=True)
    if hw_aligned:
        return pref[0] if pref else rows
    for d in pref:
        if d * hw * itemsize <= max_block_bytes:
            return d
    for d in sorted(_divisors(rows), reverse=True):
        if d * hw * itemsize <= max_block_bytes:
            return d
    return 1
    # TODO(synk): lane-fold non-128-aligned HW into the sublane axis instead of a
    # masked lane tail / 1-row blocks for pathological shapes.


def _choose_hw_tile(hw, row_tile, itemsize, max_block_bytes):
    """Largest 128-multiple divisor of hw with row_tile*hw_tile*itemsize <= cap."""
    if hw % 128 != 0:
        return hw          # full extent on lanes (legal); rows bound the block instead
    max_lanes = max(128, (max_block_bytes // max(1, row_tile * itemsize)) // 128 * 128)
    best, t = 128, 256
    limit = min(hw, max_lanes)
    while t <= limit:
        if hw % t == 0:
            best = t
        t += 128
    return best


def _choose_acc_width(hw_tile):
    """Lane width of the resident stats accumulator (multiple of 128)."""
    for w in (512, 256, 128):
        if hw_tile % w == 0:
            return w
    return 128


# ----------------------------- kernels ------------------------------------- #

def _make_stats_kernel(hw_tile, acc_w):
    """Per-row sum / sum-of-squares accumulated into lane-dense resident fp32 blocks."""
    n_chunks = hw_tile // acc_w
    rem = hw_tile - n_chunks * acc_w     # nonzero only when HW itself is < / not 128-aligned

    def kernel(x_ref, sum_ref, sq_ref):
        @pl.when(pl.program_id(1) == 0)
        def _():
            sum_ref[...] = jnp.zeros_like(sum_ref)
            sq_ref[...] = jnp.zeros_like(sq_ref)

        def _step(start):
            chunk = x_ref[:, pl.ds(start, acc_w)].astype(jnp.float32)
            sum_ref[...] += chunk            # pure VALU adds; no XLU, no narrow stores
            sq_ref[...] += chunk * chunk

        if 0 < n_chunks <= 8:
            for ci in range(n_chunks):       # static unroll at trace time
                _step(ci * acc_w)
        elif n_chunks > 8:
            @pl.loop(0, n_chunks)
            def _(ci):
                _step(pl.multiple_of(ci * acc_w, acc_w))

        if rem > 0:
            # Only reachable in the non-128-aligned HW fallback (single hw grid step).
            tail = x_ref[:, pl.ds(n_chunks * acc_w, rem)].astype(jnp.float32)
            sum_ref[:, 0:1] += jnp.sum(tail, axis=-1, keepdims=True)
            sq_ref[:, 0:1] += jnp.sum(tail * tail, axis=-1, keepdims=True)

    return kernel


def _apply_kernel(x_ref, scale_ref, shift_ref, out_ref):
    """out = x * scale - shift with per-row (= per (sample, channel)) fp32 scale/shift."""
    x = x_ref[...].astype(jnp.float32)                      # (row_tile, hw_tile)
    out_ref[...] = (x * scale_ref[...] - shift_ref[...]).astype(out_ref.dtype)


# ----------------------------- pallas wrappers ------------------------------ #

def _channel_sums(x2, row_tile, hw_tile, vmem_limit):
    """Per-row partial sums / sums-of-squares of x2 (rows, HW) as (rows, acc_w) fp32."""
    rows, hw = x2.shape
    acc_w = _choose_acc_width(hw_tile)
    n_hw = hw // hw_tile
    kernel = _make_stats_kernel(hw_tile, acc_w)
    sums, sqs = pl.pallas_call(
        kernel,
        out_shape=(jax.ShapeDtypeStruct((rows, acc_w), jnp.float32),
                   jax.ShapeDtypeStruct((rows, acc_w), jnp.float32)),
        grid=(rows // row_tile, n_hw),
        in_specs=[pl.BlockSpec((row_tile, hw_tile), lambda i, j: (i, j))],
        out_specs=(pl.BlockSpec((row_tile, acc_w), lambda i, j: (i, 0)),
                   pl.BlockSpec((row_tile, acc_w), lambda i, j: (i, 0))),
        compiler_params=pltpu.CompilerParams(
            dimension_semantics=("parallel", "arbitrary"),
            vmem_limit_bytes=vmem_limit),
        cost_estimate=pl.CostEstimate(
            flops=3 * x2.size,
            transcendentals=0,
            bytes_accessed=x2.size * x2.dtype.itemsize + 2 * rows * acc_w * 4),
    )(x2)
    return sums, sqs


def _apply_affine(x2, scale_r, shift_r, row_tile, hw_tile, vmem_limit):
    """Tiled, pipelined out = x * scale - shift over (rows, HW)."""
    rows, hw = x2.shape
    n_hw = hw // hw_tile
    return pl.pallas_call(
        _apply_kernel,
        out_shape=jax.ShapeDtypeStruct((rows, hw), x2.dtype),
        grid=(rows // row_tile, n_hw),
        in_specs=[pl.BlockSpec((row_tile, hw_tile), lambda i, j: (i, j)),
                  pl.BlockSpec((row_tile, 1), lambda i, j: (i, 0)),
                  pl.BlockSpec((row_tile, 1), lambda i, j: (i, 0))],
        out_specs=pl.BlockSpec((row_tile, hw_tile), lambda i, j: (i, j)),
        compiler_params=pltpu.CompilerParams(
            dimension_semantics=("parallel", "parallel"),
            vmem_limit_bytes=vmem_limit),
        cost_estimate=pl.CostEstimate(
            flops=2 * x2.size,
            transcendentals=0,
            bytes_accessed=2 * x2.size * x2.dtype.itemsize + 2 * rows * 4),
    )(x2, scale_r, shift_r)


# ----------------------------- module forward ------------------------------ #

def my_bn_train_forward(x, gain, bias, stored_mean, stored_var,
                        momentum=0.1, eps=1e-5):
    """Training-mode forward of myBN. Returns (out, new_stored_mean, new_stored_var)."""
    n, c, h, w = x.shape
    hw = h * w
    rows = n * c
    x2 = x.reshape(rows, hw)                         # free reshape, NO transpose
    itemsize = x.dtype.itemsize
    vmem_limit = _vmem_limit_bytes()
    hw_aligned = (hw % 128 == 0)

    # Per-pass block caps: apply keeps 2x-in + 2x-out live, stats only 2x-in.
    apply_cap = vmem_limit // 8
    stats_cap = vmem_limit // 4

    row_tile = _choose_row_tile(rows, hw, itemsize, apply_cap, hw_aligned)
    hw_tile_apply = _choose_hw_tile(hw, row_tile, itemsize, apply_cap)
    hw_tile_stats = _choose_hw_tile(hw, row_tile, itemsize, stats_cap)

    # Pass 1: per-row partial sums (fp32); tiny final reduction done in the wrapper.
    sums, sqs = _channel_sums(x2, row_tile, hw_tile_stats, vmem_limit)
    count = float(n * hw)
    mean = jnp.sum(sums.reshape(n, c, -1), axis=(0, 2)) / count   # (C,) fp32
    m2 = jnp.sum(sqs.reshape(n, c, -1), axis=(0, 2)) / count
    var = m2 - mean * mean                            # biased variance (matches reference)

    # Fold stats + per-sample gain/bias into per-(N, C) scale/shift (tiny, fp32).
    g = gain.reshape(n, c).astype(jnp.float32)
    b = bias.reshape(n, c).astype(jnp.float32)
    scale = jax.lax.rsqrt(var + eps)[None, :] * g     # (N, C)
    shift = mean[None, :] * scale - b                 # (N, C)

    # Pass 2: tiled affine apply.
    out2 = _apply_affine(x2, scale.reshape(rows, 1), shift.reshape(rows, 1),
                         row_tile, hw_tile_apply, vmem_limit)
    out = out2.reshape(n, c, h, w)

    # Buffer update side-effect of the PyTorch module, done functionally (fp32 stats).
    new_stored_mean = stored_mean * (1.0 - momentum) + mean * momentum
    new_stored_var = stored_var * (1.0 - momentum) + var * momentum
    return out, new_stored_mean, new_stored_var


def my_bn_eval_forward(x, gain, bias, stored_mean, stored_var, eps=1e-5):
    """Eval-mode forward of myBN (accumulate_standing=False path)."""
    n, c, h, w = x.shape
    hw = h * w
    rows = n * c
    x2 = x.reshape(rows, hw)
    itemsize = x.dtype.itemsize
    vmem_limit = _vmem_limit_bytes()
    hw_aligned = (hw % 128 == 0)
    apply_cap = vmem_limit // 8

    row_tile = _choose_row_tile(rows, hw, itemsize, apply_cap, hw_aligned)
    hw_tile = _choose_hw_tile(hw, row_tile, itemsize, apply_cap)

    g = gain.reshape(n, c).astype(jnp.float32)
    b = bias.reshape(n, c).astype(jnp.float32)
    m = stored_mean.astype(jnp.float32)[None, :]      # (1, C)
    v = stored_var.astype(jnp.float32)[None, :]
    scale = jax.lax.rsqrt(v + eps) * g                # (N, C)
    shift = m * scale - b

    out2 = _apply_affine(x2, scale.reshape(rows, 1), shift.reshape(rows, 1),
                         row_tile, hw_tile, vmem_limit)
    return out2.reshape(n, c, h, w)

# TODO(synk): accumulate_standing=True branch (sum-accumulate + counter divide) and
# reset_stats() are pure buffer bookkeeping; they reuse the same kernels and are omitted.


# ----------------------------- reference (pure JAX) ------------------------ #

def _ref_train(x, gain, bias, eps):
    m = jnp.mean(x, axis=(0, 2, 3), keepdims=True)
    var = jnp.mean(x * x, axis=(0, 2, 3), keepdims=True) - m * m
    scale = jax.lax.rsqrt(var + eps) * gain
    shift = m * scale - bias
    return x * scale - shift, m.reshape(-1), var.reshape(-1)


def _ref_eval(x, gain, bias, mean, var, eps):
    m = mean.reshape(1, -1, 1, 1)
    v = var.reshape(1, -1, 1, 1)
    scale = jax.lax.rsqrt(v + eps) * gain
    shift = m * scale - bias
    return x * scale - shift


# ----------------------------- main ---------------------------------------- #

if __name__ == "__main__":
    key = jax.random.PRNGKey(0)
    k1, k2, k3 = jax.random.split(key, 3)

    N, C, H, W = 2, 4, 16, 16
    eps, momentum = 1e-5, 0.1

    x = jax.random.normal(k1, (N, C, H, W), dtype=jnp.float32)
    # gain/bias as produced by conditional-BN heads: per-sample, per-channel.
    gain = 1.0 + 0.1 * jax.random.normal(k2, (N, C, 1, 1), dtype=jnp.float32)
    bias = 0.1 * jax.random.normal(k3, (N, C, 1, 1), dtype=jnp.float32)

    # Deterministic buffer init (matches myBN.__init__).
    stored_mean = jnp.zeros((C,), dtype=jnp.float32)
    stored_var = jnp.ones((C,), dtype=jnp.float32)

    # Training-mode forward (module default).
    out, new_mean, new_var = my_bn_train_forward(
        x, gain, bias, stored_mean, stored_var, momentum=momentum, eps=eps)
    jax.block_until_ready((out, new_mean, new_var))

    # Eval-mode forward using the updated running stats.
    out_eval = my_bn_eval_forward(x, gain, bias, new_mean, new_var, eps=eps)
    jax.block_until_ready(out_eval)

    # Numerical checks against plain-JAX reference.
    ref_out, ref_m, ref_v = _ref_train(x, gain, bias, eps)
    ref_new_mean = stored_mean * (1 - momentum) + ref_m * momentum
    ref_new_var = stored_var * (1 - momentum) + ref_v * momentum
    ref_out_eval = _ref_eval(x, gain, bias, ref_new_mean, ref_new_var, eps)

    assert jnp.allclose(out, ref_out, atol=1e-4, rtol=1e-4)
    assert jnp.allclose(new_mean, ref_new_mean, atol=1e-5, rtol=1e-5)
    assert jnp.allclose(new_var, ref_new_var, atol=1e-5, rtol=1e-5)
    assert jnp.allclose(out_eval, ref_out_eval, atol=1e-4, rtol=1e-4)

    print("KERNEL_OK")
</pallas_src>

<mosaic_0001>
module attributes {stable_mosaic.version = 11 : i64} {
  func.func @kernel(%arg0: i32, %arg1: i32, %arg2: memref<8x256xf32, #tpu.memory_space<vmem>>, %arg3: memref<8x256xf32, #tpu.memory_space<vmem>>, %arg4: memref<8x256xf32, #tpu.memory_space<vmem>>) attributes {dimension_semantics = [#tpu.dimension_semantics<parallel>, #tpu.dimension_semantics<arbitrary>], iteration_bounds = array<i64: 1, 1>, scalar_prefetch = 0 : i64, scratch_operands = 0 : i64, tpu.core_type = #tpu.core_type<tc>, window_params = [{transform_indices = @transform_0, window_bounds = array<i64: 8, 256>}, {transform_indices = @transform_1, window_bounds = array<i64: 8, 256>}, {transform_indices = @transform_2, window_bounds = array<i64: 8, 256>}]} {
    %c0_i32 = arith.constant 0 : i32
    %0 = arith.cmpi eq, %arg1, %c0_i32 : i32
    %1 = arith.extui %0 : i1 to i32
    %c0_i32_0 = arith.constant 0 : i32
    %2 = arith.cmpi ne, %1, %c0_i32_0 : i32
    scf.if %2 {
      %cst = arith.constant 0.000000e+00 : f32
      %11 = vector.broadcast %cst : f32 to vector<8x256xf32>
      %c0_10 = arith.constant 0 : index
      %c0_11 = arith.constant 0 : index
      %12 = vector.load %arg3[%c0_10, %c0_11] : memref<8x256xf32, #tpu.memory_space<vmem>>, vector<8x256xf32>
      tpu.vector_store %arg3[%c0_10, %c0_11], %11 {strides = array<i32>} : memref<8x256xf32, #tpu.memory_space<vmem>>, vector<8x256xf32>,
      %cst_12 = arith.constant 0.000000e+00 : f32
      %13 = vector.broadcast %cst_12 : f32 to vector<8x256xf32>
      %c0_13 = arith.constant 0 : index
      %c0_14 = arith.constant 0 : index
      %14 = vector.load %arg4[%c0_13, %c0_14] : memref<8x256xf32, #tpu.memory_space<vmem>>, vector<8x256xf32>
      tpu.vector_store %arg4[%c0_13, %c0_14], %13 {strides = array<i32>} : memref<8x256xf32, #tpu.memory_space<vmem>>, vector<8x256xf32>,
    } else {
    }
    %c0 = arith.constant 0 : index
    %c0_1 = arith.constant 0 : index
    %3 = vector.load %arg2[%c0, %c0_1] : memref<8x256xf32, #tpu.memory_space<vmem>>, vector<8x256xf32>
    %c0_2 = arith.constant 0 : index
    %c0_3 = arith.constant 0 : index
    %4 = vector.load %arg3[%c0_2, %c0_3] : memref<8x256xf32, #tpu.memory_space<vmem>>, vector<8x256xf32>
    %5 = arith.addf %4, %3 : vector<8x256xf32>
    %c0_4 = arith.constant 0 : index
    %c0_5 = arith.constant 0 : index
    %6 = vector.load %arg3[%c0_4, %c0_5] : memref<8x256xf32, #tpu.memory_space<vmem>>, vector<8x256xf32>
    tpu.vector_store %arg3[%c0_4, %c0_5], %5 {strides = array<i32>} : memref<8x256xf32, #tpu.memory_space<vmem>>, vector<8x256xf32>,
    %c0_6 = arith.constant 0 : index
    %c0_7 = arith.constant 0 : index
    %7 = vector.load %arg4[%c0_6, %c0_7] : memref<8x256xf32, #tpu.memory_space<vmem>>, vector<8x256xf32>
    %8 = arith.mulf %3, %3 : vector<8x256xf32>
    %9 = arith.addf %7, %8 : vector<8x256xf32>
    %c0_8 = arith.constant 0 : index
    %c0_9 = arith.constant 0 : index
    %10 = vector.load %arg4[%c0_8, %c0_9] : memref<8x256xf32, #tpu.memory_space<vmem>>, vector<8x256xf32>
    tpu.vector_store %arg4[%c0_8, %c0_9], %9 {strides = array<i32>} : memref<8x256xf32, #tpu.memory_space<vmem>>, vector<8x256xf32>,
    return
  }
  func.func @transform_0(%arg0: i32, %arg1: i32) -> (i32, i32) {
    %c0_i32 = arith.constant 0 : i32
    return %arg0, %arg1 : i32, i32
  }
  func.func @transform_1(%arg0: i32, %arg1: i32) -> (i32, i32) {
    %c0_i32 = arith.constant 0 : i32
    %c0_i32_0 = arith.constant 0 : i32
    return %arg0, %c0_i32 : i32, i32
  }
  func.func @transform_2(%arg0: i32, %arg1: i32) -> (i32, i32) {
    %c0_i32 = arith.constant 0 : i32
    %c0_i32_0 = arith.constant 0 : i32
    return %arg0, %c0_i32 : i32, i32
  }
}

</mosaic_0001>

<llo_original>
// kernel: tpu_custom_call.1
$region0: #{tpu_custom_call.1}
  #allocation0 [shape = 'u32[]', space=smem, size = 0x4, offset = 0x4, fixed_abs, tag = 'smem constant byte address 0x4 - core index']
  #allocation1 [shape = 'u32[144,128]{1,0:T(1,128)}', space=vmem, size = 0x12000, scoped, tag = 'internal scratch']
  %s0 = inlined_call_operand.hbm [shape: f32[8,256], index: 0, kind: input, shape index: {}]
  %s1 = inlined_call_operand.hbm [shape: f32[8,256], index: 1, kind: output, shape index: {0}]
  %s2 = inlined_call_operand.hbm [shape: f32[8,256], index: 2, kind: output, shape index: {1}]
  %3 = xla_tuple %s1, %s2
  %s4 = sld [smem:[#allocation0]]
  $region30: #{tpu_custom_call.1} parent=0
    _
  %s6 = ssub.s32 1, %s4
  %s7 = scalar_select 0, %s6, %s4
  $region1: #{tpu_custom_call.1} parent=0
    #allocation2 [shape = 'u8[8192]{0}', space=vmem, size = 0x2000, scoped, tag = 'input window, operand 0, single buffered']
    #allocation3 [shape = 's32[1]{0}', space=sflag, size = 0x4, scoped, tag = 'scoped memory for tpu_custom_call.1']
    #allocation4 [shape = 's32[1]{0}', space=sflag, size = 0x4, scoped, tag = 'scoped memory for tpu_custom_call.1']
    #allocation5 [shape = 'u8[8192]{0}', space=vmem, size = 0x2000, scoped, tag = 'output window, operand 0, single buffered']
    #allocation6 [shape = 'u8[8192]{0}', space=vmem, size = 0x2000, scoped, tag = 'output window, operand 1, single buffered']
    #allocation7 [shape = 's32[1]{0}', space=sflag, size = 0x4, scoped, tag = 'scoped memory for tpu_custom_call.1']
    %8 = vsyncpa [#allocation3], 0
    %9 = vsyncpa [#allocation4], 0
    %10 = vsyncpa [#allocation7], 0
    // Predicated region
    $region2: #{tpu_custom_call.1} parent=1 // pred_check
      _
    $region3: #{tpu_custom_call.1} parent=1 // pred_check_branch
      %12 = sbr.rel (0) target = $region5
    $region4: #{tpu_custom_call.1} parent=1 // pred_region
      %s14 = ssub.s32 256, 256
      %15 = vsyncadd [#allocation3], %s14
      %s17 = sshll.u32 [#allocation2], 4
      %s18 = int_to_ptr.vmem [resolvable:$true] %s17
      %20 = dma.hbm_to_vmem [thread:$0]  %s0, 256, %s18, [#allocation3]
    $region5: #{tpu_custom_call.1} parent=1 // pred_fallthru
      _
    // Predicated region
    $region6: #{tpu_custom_call.1} parent=1 // pred_check
      _
    $region7: #{tpu_custom_call.1} parent=1 // pred_check_branch
      %22 = sbr.rel (0) target = $region9
    $region8: #{tpu_custom_call.1} parent=1 // pred_region
      %23 = dma.done [#allocation3], 256
    $region9: #{tpu_custom_call.1} parent=1 // pred_fallthru
      _
    %p24 = scmp.eq.s32.totalorder 0, 0
    // Predicated region
    $region10: #{tpu_custom_call.1} parent=1 // pred_check
      %p25 = pneg %p24
    $region11: #{tpu_custom_call.1} parent=1 // pred_check_branch
      %27 = sbr.rel (%p25) target = $region13
    $region12: #{tpu_custom_call.1} parent=1 // pred_region
      %28 = vst [vmem:[#allocation5] sm:$0xff] 0.0
      %29 = vst [vmem:[#allocation5 + $0x8] sm:$0xff] 0.0
      %30 = vst [vmem:[#allocation6] sm:$0xff] 0.0
      %31 = vst [vmem:[#allocation6 + $0x8] sm:$0xff] 0.0
    $region13: #{tpu_custom_call.1} parent=1 // pred_fallthru
      _
    %v32 = vld [vmem:[#allocation2] sm:$0xff]
    %v33 = vld [vmem:[#allocation2 + $0x8] sm:$0xff]
    %v34 = vld [vmem:[#allocation5] sm:$0xff]
    %v35 = vld [vmem:[#allocation5 + $0x8] sm:$0xff]
    %v36 = vadd.f32 %v34, %v32
    %v37 = vadd.f32 %v35, %v33
    %38 = vst [vmem:[#allocation5] sm:$0xff] %v36
    %39 = vst [vmem:[#allocation5 + $0x8] sm:$0xff] %v37
    %v40 = vld [vmem:[#allocation6] sm:$0xff]
    %v41 = vld [vmem:[#allocation6 + $0x8] sm:$0xff]
    %v42 = vmul.f32 %v32, %v32
    %v43 = vmul.f32 %v33, %v33
    %v44 = vadd.f32 %v40, %v42
    %v45 = vadd.f32 %v41, %v43
    %46 = vst [vmem:[#allocation6] sm:$0xff] %v44
    %47 = vst [vmem:[#allocation6 + $0x8] sm:$0xff] %v45
    // Predicated region
    $region14: #{tpu_custom_call.1} parent=1 // pred_check
      _
    $region15: #{tpu_custom_call.1} parent=1 // pred_check_branch
      %49 = sbr.rel (0) target = $region17
    $region16: #{tpu_custom_call.1} parent=1 // pred_region
      %s51 = ssub.s32 256, 256
      %52 = vsyncadd [#allocation4], %s51
      %s54 = sshll.u32 [#allocation5], 4
      %s55 = int_to_ptr.vmem [resolvable:$true] %s54
      %57 = dma.vmem_to_hbm [thread:$0]  %s55, 256, %s1, [#allocation4]
    $region17: #{tpu_custom_call.1} parent=1 // pred_fallthru
      _
    // Predicated region
    $region18: #{tpu_custom_call.1} parent=1 // pred_check
      _
    $region19: #{tpu_custom_call.1} parent=1 // pred_check_branch
      %59 = sbr.rel (0) target = $region21
    $region20: #{tpu_custom_call.1} parent=1 // pred_region
      %s61 = ssub.s32 256, 256
      %62 = vsyncadd [#allocation7], %s61
      %s64 = sshll.u32 [#allocation6], 4
      %s65 = int_to_ptr.vmem [resolvable:$true] %s64
      %67 = dma.vmem_to_hbm [thread:$0]  %s65, 256, %s2, [#allocation7]
    $region21: #{tpu_custom_call.1} parent=1 // pred_fallthru
      _
    // Predicated region
    $region22: #{tpu_custom_call.1} parent=1 // pred_check
      _
    $region23: #{tpu_custom_call.1} parent=1 // pred_check_branch
      %69 = sbr.rel (0) target = $region25
    $region24: #{tpu_custom_call.1} parent=1 // pred_region
      %70 = dma.done [#allocation4], 256
    $region25: #{tpu_custom_call.1} parent=1 // pred_fallthru
      _
    // Predicated region
    $region26: #{tpu_custom_call.1} parent=1 // pred_check
      _
    $region27: #{tpu_custom_call.1} parent=1 // pred_check_branch
      %72 = sbr.rel (0) target = $region29
    $region28: #{tpu_custom_call.1} parent=1 // pred_region
      %73 = dma.done [#allocation7], 256
    $region29: #{tpu_custom_call.1} parent=1 // pred_fallthru
      _
    %74 = vsyncpa [#allocation3], 1
    %75 = vsyncpa [#allocation4], 1
    %76 = vsyncpa [#allocation7], 1

</llo_original>
